<compile_context>
chip_gen: v7x
topology: tpu7x:2x2x1
jax: 0.10.0
libtpu: 0.0.40
codegen_flags: <defaults>
</compile_context>

<pallas_src>
import jax
import jax.numpy as jnp
import numpy as np
from jax.experimental import pallas as pl
from jax.experimental.pallas import tpu as pltpu


# ----------------------------------------------------------------------------
# Primary path: zero-DMA identity.  Input and output stay in HBM (pl.ANY) and
# are aliased, so no data moves; pltpu.touch pins the output dependency so the
# aliased output is considered produced by this call.
# ----------------------------------------------------------------------------
def _zero_dma_identity_kernel(x_ref, o_ref):
    del x_ref  # aliased with o_ref; nothing to move
    pltpu.touch(o_ref)


def _identity_zero_dma(x):
    return pl.pallas_call(
        _zero_dma_identity_kernel,
        out_shape=jax.ShapeDtypeStruct(x.shape, x.dtype),
        in_specs=[pl.BlockSpec(memory_space=pl.ANY)],
        out_specs=pl.BlockSpec(memory_space=pl.ANY),
        input_output_aliases={0: 0},
        cost_estimate=pl.CostEstimate(flops=0, transcendentals=0,
                                      bytes_accessed=0),
    )(x)


# Donation at the jit boundary is what makes the alias genuinely free; without
# it XLA inserts a defensive copy of x before the aliased call.
_identity_zero_dma_jit = jax.jit(_identity_zero_dma, donate_argnums=0)


# ----------------------------------------------------------------------------
# Fallback path: explicit copy kernel (only used if the zero-DMA lowering is
# unavailable on the running jax/libtpu version).
# ----------------------------------------------------------------------------
def _copy_kernel(x_ref, o_ref):
    o_ref[...] = x_ref[...]


_SMALL_BYTES = 2 * 1024 * 1024        # single un-pipelined block only below this
_TARGET_TILE_BYTES = 2 * 1024 * 1024  # ~85% of HBM roofline; VMEM-safe everywhere


def _identity_copy(x):
    if x.size == 0:
        return x
    itemsize = jnp.dtype(x.dtype).itemsize
    nbytes = x.size * itemsize

    if nbytes <= _SMALL_BYTES:
        return pl.pallas_call(
            _copy_kernel,
            out_shape=jax.ShapeDtypeStruct(x.shape, x.dtype),
            in_specs=[pl.BlockSpec(memory_space=pltpu.MemorySpace.VMEM)],
            out_specs=pl.BlockSpec(memory_space=pltpu.MemorySpace.VMEM),
            cost_estimate=pl.CostEstimate(flops=0, transcendentals=0,
                                          bytes_accessed=2 * nbytes),
        )(x)

    # Large tensors: tile a metadata-only 2-D view (no pad / slice round trip;
    # Pallas masks the partial boundary blocks of the cdiv grid).
    orig_shape = x.shape
    lead = orig_shape[0] if x.ndim >= 2 else 1
    inner = x.size // lead
    x2 = x.reshape(lead, inner)

    sub = max(8, 32 // itemsize)                  # f32: 8, bf16: 16, int8: 32
    lane_tile = 512 if inner >= 512 else inner    # multiple of 128 or full dim
    rows = max(1, _TARGET_TILE_BYTES // (lane_tile * itemsize))
    tile_rows = max(sub, (rows // sub) * sub)
    if tile_rows >= lead:
        tile_rows = lead                          # full dim is always legal
    # If the row tile got clamped (small leading dim), widen lanes instead.
    if tile_rows * lane_tile * itemsize < _TARGET_TILE_BYTES and inner > lane_tile:
        want = _TARGET_TILE_BYTES // max(1, tile_rows * itemsize)
        lane_tile = min(inner, max(512, (want // 128) * 128))

    tile_bytes = tile_rows * lane_tile * itemsize
    grid = (pl.cdiv(lead, tile_rows), pl.cdiv(inner, lane_tile))

    out2 = pl.pallas_call(
        _copy_kernel,
        out_shape=jax.ShapeDtypeStruct((lead, inner), x.dtype),
        grid=grid,
        in_specs=[pl.BlockSpec((tile_rows, lane_tile), lambda i, j: (i, j))],
        out_specs=pl.BlockSpec((tile_rows, lane_tile), lambda i, j: (i, j)),
        compiler_params=pltpu.CompilerParams(
            # Both axes are independent copies; "parallel" shards them across
            # v7x's two TensorCores (no-op on single-TC v5e/v6e).
            dimension_semantics=("parallel", "parallel"),
            # 2 double-buffered operands (in + out) + headroom: fits v5e's
            # 16 MiB default scoped VMEM and v7x's 64 MiB physical VMEM.
            vmem_limit_bytes=int(min(48 * 1024 * 1024,
                                     4 * tile_bytes + (4 << 20))),
        ),
        cost_estimate=pl.CostEstimate(flops=0, transcendentals=0,
                                      bytes_accessed=2 * nbytes),
    )(x2)
    return out2.reshape(orig_shape)


# ----------------------------------------------------------------------------
# Public wrapper.
# ----------------------------------------------------------------------------
_ZERO_DMA_SUPPORTED = True


def dummy_module_forward(x):
    """Pallas implementation of DummyModule.forward (identity).

    NOTE: the zero-DMA path donates (invalidates) the caller's `x` buffer;
    the returned array aliases the same HBM pages.
    """
    global _ZERO_DMA_SUPPORTED
    if _ZERO_DMA_SUPPORTED:
        try:
            y = _identity_zero_dma_jit(x)
            jax.block_until_ready(y)
            return y
        except Exception:
            # TODO(synk): zero-DMA ANY-space lowering unavailable on this
            # jax/libtpu version; using the copying fallback instead.
            _ZERO_DMA_SUPPORTED = False
    return _identity_copy(x)


if __name__ == "__main__":
    key = jax.random.PRNGKey(0)
    # NCHW input consistent with a face-detect conv stack: batch=2, C=4, H=W=16.
    x = jax.random.normal(key, (2, 4, 16, 16), dtype=jnp.float32)
    x_host = np.asarray(x)  # host copy taken before the donating/aliased call

    y = dummy_module_forward(x)
    jax.block_until_ready(y)

    assert y.shape == x_host.shape
    assert y.dtype == x_host.dtype
    assert np.allclose(np.asarray(y), x_host), "identity kernel mismatch"
    print("KERNEL_OK")
</pallas_src>

<mosaic_0001>
module attributes {stable_mosaic.version = 11 : i64} {
  func.func @_zero_dma_identity_kernel(%arg0: memref<2x4x16x16xf32, #tpu.memory_space<any>>, %arg1: memref<2x4x16x16xf32, #tpu.memory_space<any>>) attributes {dimension_semantics = [], scalar_prefetch = 0 : i64, scratch_operands = 0 : i64, tpu.core_type = #tpu.core_type<tc>} {
    return
  }
}

module attributes {stable_mosaic.version = 11 : i64} {
  func.func @_copy_kernel(%arg0: memref<2x4x16x16xf32, #tpu.memory_space<vmem>>, %arg1: memref<2x4x16x16xf32, #tpu.memory_space<vmem>>) attributes {dimension_semantics = [], scalar_prefetch = 0 : i64, scratch_operands = 0 : i64, tpu.core_type = #tpu.core_type<tc>} {
    %c0 = arith.constant 0 : index
    %c0_0 = arith.constant 0 : index
    %c0_1 = arith.constant 0 : index
    %c0_2 = arith.constant 0 : index
    %0 = vector.load %arg0[%c0, %c0_0, %c0_1, %c0_2] : memref<2x4x16x16xf32, #tpu.memory_space<vmem>>, vector<2x4x16x16xf32>
    %c0_3 = arith.constant 0 : index
    %c0_4 = arith.constant 0 : index
    %c0_5 = arith.constant 0 : index
    %c0_6 = arith.constant 0 : index
    %1 = vector.load %arg1[%c0_3, %c0_4, %c0_5, %c0_6] : memref<2x4x16x16xf32, #tpu.memory_space<vmem>>, vector<2x4x16x16xf32>
    tpu.vector_store %arg1[%c0_3, %c0_4, %c0_5, %c0_6], %0 {strides = array<i32>} : memref<2x4x16x16xf32, #tpu.memory_space<vmem>>, vector<2x4x16x16xf32>,
    return
  }
}

</mosaic_0001>

<llo_original>
// kernel: _identity_zero_dma.1
$region0: #{_identity_zero_dma.1}
  #allocation0 [shape = 'u32[]', space=smem, size = 0x4, offset = 0x4, fixed_abs, tag = 'smem constant byte address 0x4 - core index']
  #allocation1 [shape = 'u32[144,128]{1,0:T(1,128)}', space=vmem, size = 0x12000, scoped, tag = 'internal scratch']
  %s0 = inlined_call_operand.hbm [shape: f32[2,4,16,16], index: 0, kind: input, shape index: {}, may-alias: {0,1}]
  %s1 = inlined_call_operand.hbm [shape: f32[2,4,16,16], index: 1, kind: output, shape index: {}, may-alias: {0,1}]
  %s2 = sld [smem:[#allocation0]]
  $region2: #{_identity_zero_dma.1} parent=0
    _
  %s4 = ssub.s32 1, %s2
  %s5 = scalar_select 0, %s4, %s2

// kernel: tpu_custom_call.1
$region0: #{tpu_custom_call.1}
  #allocation0 [shape = 'u32[]', space=smem, size = 0x4, offset = 0x4, fixed_abs, tag = 'smem constant byte address 0x4 - core index']
  #allocation1 [shape = 'u32[144,128]{1,0:T(1,128)}', space=vmem, size = 0x12000, scoped, tag = 'internal scratch']
  %s0 = inlined_call_operand.hbm [shape: f32[2,4,16,16], index: 0, kind: input, shape index: {}]
  %s1 = inlined_call_operand.hbm [shape: f32[2,4,16,16], index: 1, kind: output, shape index: {}]
  %s2 = sld [smem:[#allocation0]]
  $region18: #{tpu_custom_call.1} parent=0
    _
  %s4 = ssub.s32 1, %s2
  %s5 = scalar_select 0, %s4, %s2
  $region1: #{tpu_custom_call.1} parent=0
    #allocation2 [shape = 'u8[65536]{0}', space=vmem, size = 0x10000, scoped, tag = 'input window, operand 0, single buffered']
    #allocation3 [shape = 's32[1]{0}', space=sflag, size = 0x4, scoped, tag = 'scoped memory for tpu_custom_call.1']
    #allocation4 [shape = 's32[1]{0}', space=sflag, size = 0x4, scoped, tag = 'scoped memory for tpu_custom_call.1']
    #allocation5 [shape = 'u8[65536]{0}', space=vmem, size = 0x10000, scoped, tag = 'output window, operand 0, single buffered']
    %6 = vsyncpa [#allocation3], 0
    %7 = vsyncpa [#allocation4], 0
    // Predicated region
    $region2: #{tpu_custom_call.1} parent=1 // pred_check
      _
    $region3: #{tpu_custom_call.1} parent=1 // pred_check_branch
      %9 = sbr.rel (0) target = $region5
    $region4: #{tpu_custom_call.1} parent=1 // pred_region
      %s11 = ssub.s32 2048, 2048
      %12 = vsyncadd [#allocation3], %s11
      %s13 = sshll.u32 [#allocation2], 4
      %s14 = int_to_ptr.vmem [resolvable:$true] %s13
      %19 = dma.hbm_to_vmem [thread:$0]  %s0, 2048, %s14, [#allocation3], 128, 128, 8
    $region5: #{tpu_custom_call.1} parent=1 // pred_fallthru
      _
    // Predicated region
    $region6: #{tpu_custom_call.1} parent=1 // pred_check
      _
    $region7: #{tpu_custom_call.1} parent=1 // pred_check_branch
      %21 = sbr.rel (0) target = $region9
    $region8: #{tpu_custom_call.1} parent=1 // pred_region
      %22 = dma.done [#allocation3], 2048
    $region9: #{tpu_custom_call.1} parent=1 // pred_fallthru
      _
    %v23 = vld [vmem:[#allocation2] sm:$0xff]
    %v24 = vld [vmem:[#allocation2 + $0x8] sm:$0xff]
    %v25 = vld [vmem:[#allocation2 + $0x10] sm:$0xff]
    %v26 = vld [vmem:[#allocation2 + $0x18] sm:$0xff]
    %v27 = vld [vmem:[#allocation2 + $0x20] sm:$0xff]
    %v28 = vld [vmem:[#allocation2 + $0x28] sm:$0xff]
    %v29 = vld [vmem:[#allocation2 + $0x30] sm:$0xff]
    %v30 = vld [vmem:[#allocation2 + $0x38] sm:$0xff]
    %v31 = vld [vmem:[#allocation2 + $0x40] sm:$0xff]
    %v32 = vld [vmem:[#allocation2 + $0x48] sm:$0xff]
    %v33 = vld [vmem:[#allocation2 + $0x50] sm:$0xff]
    %v34 = vld [vmem:[#allocation2 + $0x58] sm:$0xff]
    %v35 = vld [vmem:[#allocation2 + $0x60] sm:$0xff]
    %v36 = vld [vmem:[#allocation2 + $0x68] sm:$0xff]
    %v37 = vld [vmem:[#allocation2 + $0x70] sm:$0xff]
    %v38 = vld [vmem:[#allocation2 + $0x78] sm:$0xff]
    %vm39 = vcmask 130048
    %40 = vst.msk [vmem:[#allocation5] sm:$0xff] %vm39, %v23
    %41 = vst.msk [vmem:[#allocation5 + $0x8] sm:$0xff] %vm39, %v24
    %42 = vst.msk [vmem:[#allocation5 + $0x10] sm:$0xff] %vm39, %v25
    %43 = vst.msk [vmem:[#allocation5 + $0x18] sm:$0xff] %vm39, %v26
    %44 = vst.msk [vmem:[#allocation5 + $0x20] sm:$0xff] %vm39, %v27
    %45 = vst.msk [vmem:[#allocation5 + $0x28] sm:$0xff] %vm39, %v28
    %46 = vst.msk [vmem:[#allocation5 + $0x30] sm:$0xff] %vm39, %v29
    %47 = vst.msk [vmem:[#allocation5 + $0x38] sm:$0xff] %vm39, %v30
    %48 = vst.msk [vmem:[#allocation5 + $0x40] sm:$0xff] %vm39, %v31
    %49 = vst.msk [vmem:[#allocation5 + $0x48] sm:$0xff] %vm39, %v32
    %50 = vst.msk [vmem:[#allocation5 + $0x50] sm:$0xff] %vm39, %v33
    %51 = vst.msk [vmem:[#allocation5 + $0x58] sm:$0xff] %vm39, %v34
    %52 = vst.msk [vmem:[#allocation5 + $0x60] sm:$0xff] %vm39, %v35
    %53 = vst.msk [vmem:[#allocation5 + $0x68] sm:$0xff] %vm39, %v36
    %54 = vst.msk [vmem:[#allocation5 + $0x70] sm:$0xff] %vm39, %v37
    %55 = vst.msk [vmem:[#allocation5 + $0x78] sm:$0xff] %vm39, %v38
    // Predicated region
    $region10: #{tpu_custom_call.1} parent=1 // pred_check
      _
    $region11: #{tpu_custom_call.1} parent=1 // pred_check_branch
      %57 = sbr.rel (0) target = $region13
    $region12: #{tpu_custom_call.1} parent=1 // pred_region
      %s59 = ssub.s32 2048, 2048
      %60 = vsyncadd [#allocation4], %s59
      %s61 = sshll.u32 [#allocation5], 4
      %s62 = int_to_ptr.vmem [resolvable:$true] %s61
      %67 = dma.vmem_to_hbm [thread:$0]  %s62, 2048, %s1, [#allocation4], 128, 128, 8
    $region13: #{tpu_custom_call.1} parent=1 // pred_fallthru
      _
    // Predicated region
    $region14: #{tpu_custom_call.1} parent=1 // pred_check
      _
    $region15: #{tpu_custom_call.1} parent=1 // pred_check_branch
      %69 = sbr.rel (0) target = $region17
    $region16: #{tpu_custom_call.1} parent=1 // pred_region
      %70 = dma.done [#allocation4], 2048
    $region17: #{tpu_custom_call.1} parent=1 // pred_fallthru
      _
    %71 = vsyncpa [#allocation3], 1
    %72 = vsyncpa [#allocation4], 1

</llo_original>
